<compile_context>
chip_gen: v6e
topology: v6e:2x2x1
jax: 0.10.0
libtpu: 0.0.40
codegen_flags: <defaults>
</compile_context>

<pallas_src>
import functools

import jax
import jax.numpy as jnp
from jax.experimental import pallas as pl
from jax.experimental.pallas import tpu as pltpu


def _round_up(x, m):
    return ((x + m - 1) // m) * m


# ----------------------------------------------------------------------------- kernel
def _t5_ff_kernel(x_ref, g_ref, wi_ref, wo_ref, o_ref, acc_ref, normed_ref, *, eps):
    k = pl.program_id(1)
    nk = pl.num_programs(1)

    @pl.when(k == 0)
    def _init():
        # --- T5LayerNorm: no mean subtraction, no bias (f32 math) ---
        x = x_ref[...].astype(jnp.float32)
        variance = jnp.mean(x * x, axis=-1, keepdims=True)
        normed = x * jax.lax.rsqrt(variance + eps)
        normed = g_ref[...].astype(jnp.float32) * normed
        # Cache normed in the weight dtype (bf16 MXU operands when weights are bf16).
        normed_ref[...] = normed.astype(normed_ref.dtype)
        # Pre-load the residual into the f32 accumulator.
        acc_ref[...] = x

    # --- T5DenseActDense over this d_ff tile: wi -> ReLU -> (dropout=id) -> wo ---
    h = jnp.dot(normed_ref[...], wi_ref[...], preferred_element_type=jnp.float32)
    h = jnp.maximum(h, 0.0).astype(wo_ref.dtype)
    acc_ref[...] += jnp.dot(h, wo_ref[...], preferred_element_type=jnp.float32)

    @pl.when(k == nk - 1)
    def _finalize():
        o_ref[...] = acc_ref[...].astype(o_ref.dtype)


# ----------------------------------------------------------------------- sizing logic
def _tpu_vmem_and_version():
    """Hardware-derived VMEM capacity (bytes) and a lowercase chip-version string."""
    vmem_cap = 64 << 20  # conservative default = v7x per-TC VMEM
    version = ""
    try:
        info = pltpu.get_tpu_info()
        vmem_cap = int(info.vmem_capacity_bytes)
        for attr in ("chip_version", "version", "chip_name", "name"):
            v = getattr(info, attr, None)
            if v is not None:
                version = str(v).lower()
                break
    except Exception:
        pass
    return vmem_cap, version


def _default_tm(vmem_cap, version):
    """Generation-aware row tile (arith intensity ~ 2*tm/w_isz FLOP/byte)."""
    if "v5" in version:
        return 256      # v5e already near-balanced at 256
    if "v6" in version:
        return 1024     # push well above v6e's ~680 FLOP/B crossover
    if "v7" in version:
        return 512      # keep [tm, tk] f32 intermediate modest under 64 MiB VMEM
    # Unknown: infer from VMEM size (64 MiB -> v7x-like, 128 MiB -> v5e/v6e-like).
    return 512 if vmem_cap <= (64 << 20) else 1024


def _vmem_estimate(tm, tk, d_model, x_isz, w_isz, g_isz):
    """Conservative VMEM bytes for one grid step (2 pipeline buffers per operand)."""
    x_io = 2 * tm * d_model * x_isz            # x tiles (double-buffered)
    out_io = 2 * tm * d_model * x_isz          # output tiles
    gamma = 2 * max(d_model * g_isz, 512)      # gamma (tiny)
    wi_io = 2 * d_model * tk * w_isz           # wi tile (double-buffered)
    wo_io = 2 * tk * d_model * w_isz           # wo tile (double-buffered)
    acc = tm * d_model * 4                     # f32 accumulator scratch
    normed = tm * d_model * w_isz              # cached LayerNorm output
    h_tmp = tm * tk * (4 + w_isz)              # first-dot f32 result + cast copy
    return x_io + out_io + gamma + wi_io + wo_io + acc + normed + h_tmp


def _pick_tk(d_ff, d_model, tm, x_isz, w_isz, g_isz, budget, tk_cap):
    """Largest feasible d_ff tile under the VMEM budget; prefers tk == d_ff
    (weights DMA'd exactly once and held resident across the whole grid)."""
    candidates = [d_ff]
    c = min((tk_cap // 128) * 128, d_ff - (d_ff % 128))
    while c >= 128:
        if d_ff % c == 0 and c not in candidates:
            candidates.append(c)
        c -= 128
    for tk in candidates:
        if _vmem_estimate(tm, tk, d_model, x_isz, w_isz, g_isz) <= budget:
            return tk
    return None


# ---------------------------------------------------------------------------- wrapper
def t5_layer_ff(hidden_states, gamma, wi, wo, *, eps=1e-6, tm=None, tk=None):
    """hidden_states: (B, S, d_model); gamma: (d_model,);
    wi: (d_model, d_ff)  [torch wi.weight transposed];
    wo: (d_ff, d_model)  [torch wo.weight transposed]."""
    B, S, d_model = hidden_states.shape
    d_ff = wi.shape[1]
    M = B * S

    x_dtype = hidden_states.dtype
    w_dtype = wi.dtype
    x_isz = jnp.dtype(x_dtype).itemsize
    w_isz = jnp.dtype(w_dtype).itemsize
    g_isz = jnp.dtype(gamma.dtype).itemsize

    # Sublane packing granularity: honour the narrowest dtype in play so the bf16
    # normed scratch / h cast land on fully-packed sublanes even with f32 activations.
    sub = 16 if (x_dtype == jnp.bfloat16 or w_dtype == jnp.bfloat16) else 8

    vmem_cap, version = _tpu_vmem_and_version()
    budget = int(vmem_cap * 0.85)               # headroom for compiler-internal scratch
    tk_cap = 1024 if "v5" in version else 2048  # streaming-tile cap (v5e keeps tk modest)

    # --- row tile ---
    tm_req = tm if tm is not None else _default_tm(vmem_cap, version)
    tm_eff = min(tm_req, _round_up(M, sub))
    tm_eff = max(_round_up(tm_eff, sub), sub)
    M_pad = _round_up(M, tm_eff)

    # Megacore: ensure >= 2 row tiles so the "parallel" axis can shard across both
    # v7x TensorCores (an extra ~0.35us grid step on 1-TC chips is negligible).
    if M_pad // tm_eff < 2 and tm_eff >= 2 * sub:
        tm_eff = max(_round_up((tm_eff + 1) // 2, sub), sub)
        M_pad = _round_up(M, tm_eff)

    # --- d_ff tile (VMEM-budget-aware) ---
    if tk is not None:
        if not (tk == d_ff or (tk >= 128 and tk % 128 == 0 and d_ff % tk == 0)):
            raise ValueError("tk must equal d_ff or be a multiple of 128 dividing d_ff")
        tk_eff = tk
    else:
        tm_try = tm_eff
        tk_eff = None
        while True:
            tk_eff = _pick_tk(d_ff, d_model, tm_try, x_isz, w_isz, g_isz, budget, tk_cap)
            if tk_eff is not None or tm_try <= sub:
                break
            tm_try = max(_round_up(tm_try // 2, sub), sub)
        if tk_eff is None:
            # Last resort: smallest legal tiles; rely on the explicit vmem_limit below.
            tk_eff = 128 if (d_ff % 128 == 0 and d_ff > 128) else d_ff
        tm_eff = tm_try
        M_pad = _round_up(M, tm_eff)

    # --- hardware-derived VMEM limit (never exceeds the physical per-TC capacity) ---
    est = _vmem_estimate(tm_eff, tk_eff, d_model, x_isz, w_isz, g_isz)
    vmem_limit = int(min(max(est * 1.25 + (2 << 20), 16 << 20), vmem_cap * 0.9))

    # --- data prep ---
    x2d = hidden_states.reshape(M, d_model)
    if M_pad != M:
        # Padded rows are zeros -> variance 0 -> rsqrt(eps) finite -> output rows 0.
        x2d = jnp.pad(x2d, ((0, M_pad - M), (0, 0)))
    g2d = gamma.reshape(1, d_model)

    kernel = functools.partial(_t5_ff_kernel, eps=eps)

    out = pl.pallas_call(
        kernel,
        out_shape=jax.ShapeDtypeStruct((M_pad, d_model), x_dtype),
        grid_spec=pltpu.PrefetchScalarGridSpec(
            num_scalar_prefetch=0,
            grid=(M_pad // tm_eff, d_ff // tk_eff),
            in_specs=[
                pl.BlockSpec((tm_eff, d_model), lambda i, k: (i, 0)),   # x (rows)
                pl.BlockSpec((1, d_model), lambda i, k: (0, 0)),        # gamma
                pl.BlockSpec((d_model, tk_eff), lambda i, k: (0, k)),   # wi tile
                pl.BlockSpec((tk_eff, d_model), lambda i, k: (k, 0)),   # wo tile
            ],
            out_specs=pl.BlockSpec((tm_eff, d_model), lambda i, k: (i, 0)),
            scratch_shapes=[
                pltpu.VMEM((tm_eff, d_model), jnp.float32),   # f32 accumulator (+residual)
                pltpu.VMEM((tm_eff, d_model), w_dtype),       # cached LayerNorm output
            ],
        ),
        compiler_params=pltpu.CompilerParams(
            dimension_semantics=("parallel", "arbitrary"),
            vmem_limit_bytes=vmem_limit,
        ),
    )(x2d, g2d, wi, wo)

    if M_pad != M:
        out = out[:M]
    return out.reshape(B, S, d_model)


# ---------------------------------------------------------------------------- reference
def _reference(hidden_states, gamma, wi, wo, eps=1e-6):
    x = hidden_states.astype(jnp.float32)
    var = jnp.mean(x * x, axis=-1, keepdims=True)
    normed = gamma.astype(jnp.float32) * (x * jax.lax.rsqrt(var + eps))
    h = jnp.maximum(normed @ wi.astype(jnp.float32), 0.0)
    y = h @ wo.astype(jnp.float32)
    return hidden_states.astype(jnp.float32) + y


if __name__ == "__main__":
    # TODO(synk): dropout layers are identity (eval mode); training-mode dropout not implemented.
    # TODO(synk): only the non-gated T5DenseActDense (ReLU) branch of T5LayerFF is implemented.
    key = jax.random.PRNGKey(0)
    k1, k2, k3, k4, k5, k6 = jax.random.split(key, 6)

    # --- small T5-ish config: d_model=32, d_ff=64, batch=2, seq=8 ---
    B, S, d_model, d_ff = 2, 8, 32, 64
    hidden_states = jax.random.normal(k1, (B, S, d_model), dtype=jnp.float32)
    gamma = jnp.ones((d_model,), dtype=jnp.float32)                   # T5LayerNorm weight
    wi = jax.random.normal(k2, (d_model, d_ff), jnp.float32) * 0.05   # wi.weight.T
    wo = jax.random.normal(k3, (d_ff, d_model), jnp.float32) * 0.05   # wo.weight.T

    # 1) f32, resident-weight path (tk == d_ff)
    out = jax.block_until_ready(t5_layer_ff(hidden_states, gamma, wi, wo))
    ref = _reference(hidden_states, gamma, wi, wo)
    assert jnp.allclose(out, ref, atol=1e-4, rtol=1e-4), "f32 mismatch vs reference"

    # 2) f32, M not a multiple of the sublane tile (exercises the padding path)
    hs_odd = hidden_states[:, :7, :]
    out_odd = jax.block_until_ready(t5_layer_ff(hs_odd, gamma, wi, wo))
    ref_odd = _reference(hs_odd, gamma, wi, wo)
    assert jnp.allclose(out_odd, ref_odd, atol=1e-4, rtol=1e-4), "padded-M mismatch"

    # 3) bf16 activations + weights (bf16 MXU operands, f32 accumulation)
    hs_bf = hidden_states.astype(jnp.bfloat16)
    out_bf = jax.block_until_ready(
        t5_layer_ff(hs_bf, gamma.astype(jnp.bfloat16),
                    wi.astype(jnp.bfloat16), wo.astype(jnp.bfloat16)))
    ref_bf = _reference(hs_bf, gamma, wi, wo)
    assert jnp.allclose(out_bf.astype(jnp.float32), ref_bf, atol=1e-1, rtol=1e-1), \
        "bf16 mismatch vs reference"

    # 4) forced weight-streaming path (tk < d_ff) + multiple row tiles: exercises the
    #    resident f32 accumulator over the d_ff reduction and the megacore row split.
    B2, S2, dm2, dff2 = 2, 64, 128, 512
    hs2 = jax.random.normal(k4, (B2, S2, dm2), dtype=jnp.float32)
    g2 = 1.0 + 0.1 * jax.random.normal(k5, (dm2,), dtype=jnp.float32)
    wi2 = jax.random.normal(k6, (dm2, dff2), jnp.float32) * 0.05
    wo2 = jax.random.normal(k1, (dff2, dm2), jnp.float32) * 0.05
    out2 = jax.block_until_ready(t5_layer_ff(hs2, g2, wi2, wo2, tk=256))
    ref2 = _reference(hs2, g2, wi2, wo2)
    assert jnp.allclose(out2, ref2, atol=2e-2, rtol=2e-2), "streaming-tk mismatch"

    print("KERNEL_OK")
</pallas_src>

<mosaic_0001>
module attributes {stable_mosaic.version = 11 : i64} {
  func.func @_t5_ff_kernel(%arg0: i32, %arg1: i32, %arg2: memref<8x32xf32, #tpu.memory_space<vmem>>, %arg3: memref<1x32xf32, #tpu.memory_space<vmem>>, %arg4: memref<32x64xf32, #tpu.memory_space<vmem>>, %arg5: memref<64x32xf32, #tpu.memory_space<vmem>>, %arg6: memref<8x32xf32, #tpu.memory_space<vmem>>, %arg7: memref<8x32xf32, #tpu.memory_space<vmem>>, %arg8: memref<8x32xf32, #tpu.memory_space<vmem>>) attributes {dimension_semantics = [#tpu.dimension_semantics<parallel>, #tpu.dimension_semantics<arbitrary>], iteration_bounds = array<i64: 2, 1>, scalar_prefetch = 0 : i64, scratch_operands = 2 : i64, tpu.core_type = #tpu.core_type<tc>, window_params = [{transform_indices = @transform_0, window_bounds = array<i64: 8, 32>}, {pipeline_mode = #tpu.pipeline_mode<synchronous>, transform_indices = @transform_1, window_bounds = array<i64: 1, 32>}, {transform_indices = @transform_2, window_bounds = array<i64: 32, 64>}, {transform_indices = @transform_3, window_bounds = array<i64: 64, 32>}, {transform_indices = @transform_4, window_bounds = array<i64: 8, 32>}]} {
    %c0_i32 = arith.constant 0 : i32
    %0 = arith.cmpi eq, %arg1, %c0_i32 : i32
    %1 = arith.extui %0 : i1 to i32
    %c0_i32_0 = arith.constant 0 : i32
    %2 = arith.cmpi ne, %1, %c0_i32_0 : i32
    scf.if %2 {
      %c0_14 = arith.constant 0 : index
      %c0_15 = arith.constant 0 : index
      %16 = vector.load %arg2[%c0_14, %c0_15] : memref<8x32xf32, #tpu.memory_space<vmem>>, vector<8x32xf32>
      %17 = arith.mulf %16, %16 : vector<8x32xf32>
      %cst_16 = arith.constant dense<0.000000e+00> : vector<8xf32>
      %18 = vector.multi_reduction <add>, %17, %cst_16 [1] : vector<8x32xf32> to vector<8xf32>
      %19 = vector.shape_cast %18 : vector<8xf32> to vector<8x1xf32>
      %cst_17 = arith.constant 3.200000e+01 : f32
      %20 = vector.broadcast %cst_17 : f32 to vector<8x1xf32>
      %21 = arith.divf %19, %20 : vector<8x1xf32>
      %cst_18 = arith.constant 9.99999997E-7 : f32
      %22 = vector.broadcast %cst_18 : f32 to vector<8x1xf32>
      %23 = arith.addf %21, %22 : vector<8x1xf32>
      %24 = math.rsqrt %23 : vector<8x1xf32>
      %25 = vector.broadcast %24 : vector<8x1xf32> to vector<8x32xf32>
      %26 = arith.mulf %16, %25 : vector<8x32xf32>
      %c0_19 = arith.constant 0 : index
      %c0_20 = arith.constant 0 : index
      %27 = vector.load %arg3[%c0_19, %c0_20] : memref<1x32xf32, #tpu.memory_space<vmem>>, vector<1x32xf32>
      %28 = vector.broadcast %27 : vector<1x32xf32> to vector<8x32xf32>
      %29 = arith.mulf %28, %26 : vector<8x32xf32>
      %c0_21 = arith.constant 0 : index
      %c0_22 = arith.constant 0 : index
      %30 = vector.load %arg8[%c0_21, %c0_22] : memref<8x32xf32, #tpu.memory_space<vmem>>, vector<8x32xf32>
      tpu.vector_store %arg8[%c0_21, %c0_22], %29 {strides = array<i32>} : memref<8x32xf32, #tpu.memory_space<vmem>>, vector<8x32xf32>,
      %c0_23 = arith.constant 0 : index
      %c0_24 = arith.constant 0 : index
      %31 = vector.load %arg7[%c0_23, %c0_24] : memref<8x32xf32, #tpu.memory_space<vmem>>, vector<8x32xf32>
      tpu.vector_store %arg7[%c0_23, %c0_24], %16 {strides = array<i32>} : memref<8x32xf32, #tpu.memory_space<vmem>>, vector<8x32xf32>,
    } else {
    }
    %c0 = arith.constant 0 : index
    %c0_1 = arith.constant 0 : index
    %3 = vector.load %arg8[%c0, %c0_1] : memref<8x32xf32, #tpu.memory_space<vmem>>, vector<8x32xf32>
    %c0_2 = arith.constant 0 : index
    %c0_3 = arith.constant 0 : index
    %4 = vector.load %arg4[%c0_2, %c0_3] : memref<32x64xf32, #tpu.memory_space<vmem>>, vector<32x64xf32>
    %cst = arith.constant dense<0.000000e+00> : vector<8x64xf32>
    %5 = tpu.matmul %3, %4, %cst {dimension_numbers = #tpu.dot_dimension_numbers<[1], [0], [0], [1], [0, 0, 1, 1], [], []>} : vector<8x32xf32>, vector<32x64xf32>, vector<8x64xf32> -> vector<8x64xf32>
    %cst_4 = arith.constant 0.000000e+00 : f32
    %6 = vector.broadcast %cst_4 : f32 to vector<8x64xf32>
    %7 = arith.maximumf %5, %6 : vector<8x64xf32>
    %c0_5 = arith.constant 0 : index
    %c0_6 = arith.constant 0 : index
    %8 = vector.load %arg7[%c0_5, %c0_6] : memref<8x32xf32, #tpu.memory_space<vmem>>, vector<8x32xf32>
    %c0_7 = arith.constant 0 : index
    %c0_8 = arith.constant 0 : index
    %9 = vector.load %arg5[%c0_7, %c0_8] : memref<64x32xf32, #tpu.memory_space<vmem>>, vector<64x32xf32>
    %cst_9 = arith.constant dense<0.000000e+00> : vector<8x32xf32>
    %10 = tpu.matmul %7, %9, %cst_9 {dimension_numbers = #tpu.dot_dimension_numbers<[1], [0], [0], [1], [0, 0, 1, 1], [], []>} : vector<8x64xf32>, vector<64x32xf32>, vector<8x32xf32> -> vector<8x32xf32>
    %11 = arith.addf %8, %10 : vector<8x32xf32>
    %c0_10 = arith.constant 0 : index
    %c0_11 = arith.constant 0 : index
    %12 = vector.load %arg7[%c0_10, %c0_11] : memref<8x32xf32, #tpu.memory_space<vmem>>, vector<8x32xf32>
    tpu.vector_store %arg7[%c0_10, %c0_11], %11 {strides = array<i32>} : memref<8x32xf32, #tpu.memory_space<vmem>>, vector<8x32xf32>,
    %c0_i32_12 = arith.constant 0 : i32
    %13 = arith.cmpi eq, %arg1, %c0_i32_12 : i32
    %14 = arith.extui %13 : i1 to i32
    %c0_i32_13 = arith.constant 0 : i32
    %15 = arith.cmpi ne, %14, %c0_i32_13 : i32
    scf.if %15 {
      %c0_14 = arith.constant 0 : index
      %c0_15 = arith.constant 0 : index
      %16 = vector.load %arg7[%c0_14, %c0_15] : memref<8x32xf32, #tpu.memory_space<vmem>>, vector<8x32xf32>
      %c0_16 = arith.constant 0 : index
      %c0_17 = arith.constant 0 : index
      %17 = vector.load %arg6[%c0_16, %c0_17] : memref<8x32xf32, #tpu.memory_space<vmem>>, vector<8x32xf32>
      tpu.vector_store %arg6[%c0_16, %c0_17], %16 {strides = array<i32>} : memref<8x32xf32, #tpu.memory_space<vmem>>, vector<8x32xf32>,
    } else {
    }
    return
  }
  func.func @transform_0(%arg0: i32, %arg1: i32) -> (i32, i32) {
    %c0_i32 = arith.constant 0 : i32
    %c0_i32_0 = arith.constant 0 : i32
    return %arg0, %c0_i32 : i32, i32
  }
  func.func @transform_1(%arg0: i32, %arg1: i32) -> (i32, i32) {
    %c0_i32 = arith.constant 0 : i32
    %c0_i32_0 = arith.constant 0 : i32
    %c0_i32_1 = arith.constant 0 : i32
    return %c0_i32, %c0_i32_0 : i32, i32
  }
  func.func @transform_2(%arg0: i32, %arg1: i32) -> (i32, i32) {
    %c0_i32 = arith.constant 0 : i32
    %c0_i32_0 = arith.constant 0 : i32
    return %c0_i32, %arg1 : i32, i32
  }
  func.func @transform_3(%arg0: i32, %arg1: i32) -> (i32, i32) {
    %c0_i32 = arith.constant 0 : i32
    %c0_i32_0 = arith.constant 0 : i32
    return %arg1, %c0_i32 : i32, i32
  }
  func.func @transform_4(%arg0: i32, %arg1: i32) -> (i32, i32) {
    %c0_i32 = arith.constant 0 : i32
    %c0_i32_0 = arith.constant 0 : i32
    return %arg0, %c0_i32 : i32, i32
  }
}

</mosaic_0001>

<llo_original>
// kernel: tpu_custom_call.1
$region0: #{tpu_custom_call.1}
  #allocation0 [shape = 'u32[]', space=smem, size = 0x4, offset = 0x4, fixed_abs, tag = 'smem constant byte address 0x4 - core index']
  #allocation1 [shape = 'u32[144,128]{1,0:T(1,128)}', space=vmem, size = 0x12000, scoped, tag = 'internal scratch']
  #allocation2 [shape = 'f32[8,32]{1,0:T(8,128)}', space=vmem, size = 0x1000, scoped, tag = 'scratch operand']
  #allocation3 [shape = 'f32[8,32]{1,0:T(8,128)}', space=vmem, size = 0x1000, scoped, tag = 'scratch operand']
  %s0 = inlined_call_operand.vmem [shape: f32[16,32], index: 0, kind: input, shape index: {}]
  %s1 = inlined_call_operand.vmem [shape: f32[1,32], index: 1, kind: input, shape index: {}]
  %s2 = inlined_call_operand.vmem [shape: f32[32,64], index: 2, kind: input, shape index: {}]
  %s3 = inlined_call_operand.vmem [shape: f32[64,32], index: 3, kind: input, shape index: {}]
  %s4 = inlined_call_operand.hbm [shape: f32[16,32], index: 4, kind: output, shape index: {}]
  %s5 = sld [smem:[#allocation0]]
  $region57: #{tpu_custom_call.1} parent=0
    _
  %s7 = ssub.s32 1, %s5
  %s8 = scalar_select 0, %s7, %s5
  $region1: #{tpu_custom_call.1} parent=0
    #allocation4 [shape = 'u8[8192]{0}', space=vmem, size = 0x2000, scoped, tag = 'output window, operand 0']
    #allocation5 [shape = 's32[2]{0}', space=sflag, size = 0x8, scoped, tag = 'scoped memory for tpu_custom_call.1']
    %9 = vsyncpa [#allocation5], 0
    %s10 = scalar_lea.sflag [#allocation5], 1
    %11 = vsyncpa %s10, 0
    loop: start=0, step=1, limit=4
    $region2: #{tpu_custom_call.1} parent=1 // loop_pre_header
      _
    $region3: #{tpu_custom_call.1} parent=1 // loop_header
      %s13 = sphi 0, %s17
      %p14 = scmp.ge.s32.totalorder %s13, 4
      %s20 = sphi 0, %s32
      %s21 = sphi 0, %s28
      %s22 = sphi 0, %s20
      %s23 = sphi 0, %s21
      %s24 = sphi 0, %s22
      %s25 = sphi 0, %s23
      %s35 = sphi 0, %s37
      %s38 = sphi 0, %s35
      %s39 = sphi 0, %s38
      %s55 = sphi 0, %s39
      %s59 = sphi 0, %s59
      %s61 = sphi 0, %s59
      %s62 = sphi 0, %s61
      %s76 = sphi 0, %s62
      %s82 = sphi 0, %s84
      %s85 = sphi 0, %s82
      %s86 = sphi 0, %s85
      %s102 = sphi 0, %s86
      %s108 = sphi 0, %s110
      %s111 = sphi 0, %s108
      %s112 = sphi 0, %s111
      %s128 = sphi 0, %s112
      %s134 = sphi 0, %s136
      %s137 = sphi 0, %s134
      %s138 = sphi 0, %s137
      %s154 = sphi 0, %s138
    $region4: #{tpu_custom_call.1} parent=1 // loop_header_branch
      %16 = sbr.rel (%p14) target = $region8
    $region5: #{tpu_custom_call.1} parent=1 // loop_body
      %s18 = ssub.s32 %s13, 1
      %s19 = ssub.s32 %s13, 2
      %s26 = sadd.s32 1, %s21
      %p27 = scmp.ge.s32.totalorder %s26, 1
      %s28 = scalar_select %p27, 0, %s26
      %s29 = sadd.s32 1, %s20
      %s30 = scalar_select %p27, %s29, %s20
      %p31 = scmp.ge.s32.totalorder %s30, 2
      %s32 = scalar_select %p31, 0, %s30
      %s33 = ssub.s32 %s20, %s32
      %p34 = scmp.eq.s32.totalorder %s33, 0
      %s36 = sadd.s32 %s35, 1
      %s37 = scalar_select %p34, %s35, %s36
      %p40 = pneg %p34
      %p41 = scmp.eq.s32.totalorder %s13, 1
      %p42 = por %p40, %p41
      %p43 = scmp.ne.s32.totalorder %s35, %s38
      %p44 = scmp.eq.s32.totalorder %s13, 0
      %p45 = por %p43, %p44
      %p46 = scmp.ne.s32.totalorder %s35, %s38
      %p47 = scmp.eq.s32.totalorder %s18, 1
      %p48 = por %p46, %p47
      %p49 = scmp.ne.s32.totalorder %s38, %s39
      %p50 = scmp.eq.s32.totalorder %s18, 0
      %p51 = por %p49, %p50
      %p52 = scmp.ne.s32.totalorder %s38, %s39
      %p53 = scmp.eq.s32.totalorder %s19, 1
      %p54 = por %p52, %p53
      %p56 = scmp.ne.s32.totalorder %s39, %s55
      %p57 = scmp.eq.s32.totalorder %s19, 0
      %p58 = por %p56, %p57
      %s60 = sadd.s32 %s59, 1
      %p63 = scmp.eq.s32.totalorder %s13, 1
      %p64 = scmp.ne.s32.totalorder %s59, %s61
      %p65 = scmp.eq.s32.totalorder %s13, 0
      %p66 = por %p64, %p65
      %p67 = scmp.ne.s32.totalorder %s59, %s61
      %p68 = scmp.eq.s32.totalorder %s18, 1
      %p69 = por %p67, %p68
      %p70 = scmp.ne.s32.totalorder %s61, %s62
      %p71 = scmp.eq.s32.totalorder %s18, 0
      %p72 = por %p70, %p71
      %p73 = scmp.ne.s32.totalorder %s61, %s62
      %p74 = scmp.eq.s32.totalorder %s19, 1
      %p75 = por %p73, %p74
      %p77 = scmp.ne.s32.totalorder %s62, %s76
      %p78 = scmp.eq.s32.totalorder %s19, 0
      %p79 = por %p77, %p78
      %s80 = ssub.s32 %s21, %s28
      %p81 = scmp.eq.s32.totalorder %s80, 0
      %s83 = sadd.s32 %s82, 1
      %s84 = scalar_select %p81, %s82, %s83
      %p87 = pneg %p81
      %p88 = scmp.eq.s32.totalorder %s13, 1
      %p89 = por %p87, %p88
      %p90 = scmp.ne.s32.totalorder %s82, %s85
      %p91 = scmp.eq.s32.totalorder %s13, 0
      %p92 = por %p90, %p91
      %p93 = scmp.ne.s32.totalorder %s82, %s85
      %p94 = scmp.eq.s32.totalorder %s18, 1
      %p95 = por %p93, %p94
      %p96 = scmp.ne.s32.totalorder %s85, %s86
      %p97 = scmp.eq.s32.totalorder %s18, 0
      %p98 = por %p96, %p97
      %p99 = scmp.ne.s32.totalorder %s85, %s86
      %p100 = scmp.eq.s32.totalorder %s19, 1
      %p101 = por %p99, %p100
      %p103 = scmp.ne.s32.totalorder %s86, %s102
      %p104 = scmp.eq.s32.totalorder %s19, 0
      %p105 = por %p103, %p104
      %s106 = ssub.s32 %s21, %s28
      %p107 = scmp.eq.s32.totalorder %s106, 0
      %s109 = sadd.s32 %s108, 1
      %s110 = scalar_select %p107, %s108, %s109
      %p113 = pneg %p107
      %p114 = scmp.eq.s32.totalorder %s13, 1
      %p115 = por %p113, %p114
      %p116 = scmp.ne.s32.totalorder %s108, %s111
      %p117 = scmp.eq.s32.totalorder %s13, 0
      %p118 = por %p116, %p117
      %p119 = scmp.ne.s32.totalorder %s108, %s111
      %p120 = scmp.eq.s32.totalorder %s18, 1
      %p121 = por %p119, %p120
      %p122 = scmp.ne.s32.totalorder %s111, %s112
      %p123 = scmp.eq.s32.totalorder %s18, 0
      %p124 = por %p122, %p123
      %p125 = scmp.ne.s32.totalorder %s111, %s112
      %p126 = scmp.eq.s32.totalorder %s19, 1
      %p127 = por %p125, %p126
      %p129 = scmp.ne.s32.totalorder %s112, %s128
      %p130 = scmp.eq.s32.totalorder %s19, 0
      %p131 = por %p129, %p130
      %s132 = ssub.s32 %s20, %s32
      %p133 = scmp.eq.s32.totalorder %s132, 0
      %s135 = sadd.s32 %s134, 1
      %s136 = scalar_select %p133, %s134, %s135
      %p139 = pneg %p133
      %p140 = scmp.eq.s32.totalorder %s13, 1
      %p141 = por %p139, %p140
      %p142 = scmp.ne.s32.totalorder %s134, %s137
      %p143 = scmp.eq.s32.totalorder %s13, 0
      %p144 = por %p142, %p143
      %p145 = scmp.ne.s32.totalorder %s134, %s137
      %p146 = scmp.eq.s32.totalorder %s18, 1
      %p147 = por %p145, %p146
      %p148 = scmp.ne.s32.totalorder %s137, %s138
      %p149 = scmp.eq.s32.totalorder %s18, 0
      %p150 = por %p148, %p149
      %p151 = scmp.ne.s32.totalorder %s137, %s138
      %p152 = scmp.eq.s32.totalorder %s19, 1
      %p153 = por %p151, %p152
      %p155 = scmp.ne.s32.totalorder %s138, %s154
      %p156 = scmp.eq.s32.totalorder %s19, 0
      %p157 = por %p155, %p156
      %p158 = scmp.le.s32.totalorder 1, %s13
      %p159 = scmp.lt.s32.totalorder %s13, 3
      %p160 = pnand %p158, %p159
      %p161 = pneg %p160
      // Predicated region
      $region9: #{tpu_custom_call.1} parent=5 // pred_check
        _
      $region10: #{tpu_custom_call.1} parent=5 // pred_check_branch
        %163 = sbr.rel (%p160) target = $region12
      $region11: #{tpu_custom_call.1} parent=5 // pred_region
        %s164 = ssub.s32 %s13, 1
        // Predicated region
        $region13: #{tpu_custom_call.1} parent=11 // pred_check
          %p165 = pneg %p72
        $region14: #{tpu_custom_call.1} parent=11 // pred_check_branch
          %167 = sbr.rel (%p165) target = $region16
        $region15: #{tpu_custom_call.1} parent=11 // pred_region
          _
        $region16: #{tpu_custom_call.1} parent=11 // pred_fallthru
          _
        // Predicated region
        $region17: #{tpu_custom_call.1} parent=11 // pred_check
          %p168 = pneg %p98
        $region18: #{tpu_custom_call.1} parent=11 // pred_check_branch
          %170 = sbr.rel (%p168) target = $region20
        $region19: #{tpu_custom_call.1} parent=11 // pred_region
          %p171 = scmp.lt.s32.totalorder %s23, 0
          %s172 = scalar_select %p171, %s23, 0
          %s173 = smul.addr %s172, 8
          %s174 = scalar_lea.vmem %s2, %s173
        $region20: #{tpu_custom_call.1} parent=11 // pred_fallthru
          _
        // Predicated region
        $region21: #{tpu_custom_call.1} parent=11 // pred_check
          %p175 = pneg %p124
        $region22: #{tpu_custom_call.1} parent=11 // pred_check_branch
          %177 = sbr.rel (%p175) target = $region24
        $region23: #{tpu_custom_call.1} parent=11 // pred_region
          %s178 = smul.u32 8, %s23
          %p179 = scmp.lt.s32.totalorder %s178, 7
          %s180 = scalar_select %p179, %s178, 7
          %s181 = smul.addr %s180, 8
          %s182 = scalar_lea.vmem %s3, %s181
          %s183 = smul.u32 8, %s23
        $region24: #{tpu_custom_call.1} parent=11 // pred_fallthru
          _
      $region12: #{tpu_custom_call.1} parent=5 // pred_fallthru
        _
      %p184 = scmp.lt.s32.totalorder %s13, 2
      // Predicated region
      $region25: #{tpu_custom_call.1} parent=5 // pred_check
        %p185 = pneg %p184
      $region26: #{tpu_custom_call.1} parent=5 // pred_check_branch
        %187 = sbr.rel (%p185) target = $region28
      $region27: #{tpu_custom_call.1} parent=5 // pred_region
        // Predicated region
        $region29: #{tpu_custom_call.1} parent=27 // pred_check
          %p188 = pneg %p45
        $region30: #{tpu_custom_call.1} parent=27 // pred_check_branch
          %190 = sbr.rel (%p188) target = $region32
        $region31: #{tpu_custom_call.1} parent=27 // pred_region
          %p191 = scmp.lt.s32.totalorder %s20, 1
          %s192 = scalar_select %p191, %s20, 1
          %s193 = smul.addr %s192, 8
          %s194 = scalar_lea.vmem %s0, %s193
        $region32: #{tpu_custom_call.1} parent=27 // pred_fallthru
          _
      $region28: #{tpu_custom_call.1} parent=5 // pred_fallthru
        _
      %p195 = scmp.le.s32.totalorder 1, %s13
      %p196 = scmp.lt.s32.totalorder %s13, 3
      %p197 = pnand %p195, %p196
      %p198 = pneg %p197
      // Predicated region
      $region33: #{tpu_custom_call.1} parent=5 // pred_check
        _
      $region34: #{tpu_custom_call.1} parent=5 // pred_check_branch
        %200 = sbr.rel (%p197) target = $region36
      $region35: #{tpu_custom_call.1} parent=5 // pred_region
        %s201 = ssub.s32 %s13, 1
        %p202 = scmp.lt.s32.totalorder %s22, 1
        %s203 = scalar_select %p202, %s22, 1
        %s204 = smul.addr %s203, 8
        %s205 = scalar_lea.vmem %s0, %s204
        %p206 = pneg %p51
        %p207 = pneg %p48
        %p208 = pneg %p72
        %p209 = pneg %p69
        %p210 = scmp.lt.s32.totalorder %s23, 0
        %s211 = scalar_select %p210, %s23, 0
        %s212 = smul.addr %s211, 8
        %s213 = scalar_lea.vmem %s2, %s212
        %p214 = pneg %p98
        %p215 = pneg %p95
        %s216 = smul.u32 8, %s23
        %p217 = scmp.lt.s32.totalorder %s216, 7
        %s218 = scalar_select %p217, %s216, 7
        %s219 = smul.addr %s218, 8
        %s220 = scalar_lea.vmem %s3, %s219
        %p221 = pneg %p124
        %p222 = pneg %p121
        %p223 = pneg %p150
        %p224 = pneg %p147
        %s225 = sand.u32 %s137, 1
        %s226 = scalar_lea.sflag [#allocation5], %s225
        %s227 = sand.u32 %s137, 1
        %s228 = smul.addr %s227, 8
        %s229 = scalar_lea.vmem [#allocation4], %s228
        %p230 = scmp.lt.s32.totalorder %s22, 1
        %s231 = scalar_select %p230, %s22, 1
        %s232 = smul.addr %s231, 8
        %s233 = scalar_lea.vmem %s0, %s232
        %p234 = scmp.lt.s32.totalorder %s23, 0
        %s235 = scalar_select %p234, %s23, 0
        %s236 = smul.addr %s235, 8
        %s237 = scalar_lea.vmem %s2, %s236
        %s238 = smul.u32 8, %s23
        %p239 = scmp.lt.s32.totalorder %s238, 7
        %s240 = scalar_select %p239, %s238, 7
        %s241 = smul.addr %s240, 8
        %s242 = scalar_lea.vmem %s3, %s241
        %s243 = smul.u32 8, %s23
        %p244 = scmp.eq.s32.totalorder %s23, 0
        // Predicated region
        $region37: #{tpu_custom_call.1} parent=35 // pred_check
          %p245 = pneg %p244
        $region38: #{tpu_custom_call.1} parent=35 // pred_check_branch
          %247 = sbr.rel (%p245) target = $region40
        $region39: #{tpu_custom_call.1} parent=35 // pred_region
          %v248 = vld [vmem:[%s233] sm:$0xff]
          %v249 = vmul.f32 %v248, %v248
          %vm250 = vcmask 261120
          %v251 = vsel %vm250, %v249, 0.0
          %252 = vadd.xlane.f32.xlu0 %v251
          %v253 = vpop.xlane.xlu0 %252
          %v254 = vrcp.pop 32.0
          %v255 = vmul.f32 %v253, %v254
          %v256 = vadd.f32 %v255, 1e-06
          %v257 = vrsqrt.pop %v256
          %v258 = vmul.f32 %v248, %v257
          %v259 = vld [vmem:[%s1] sm:$0x1]
          %v261 = vlaneseq
          %v262 = vshrl.u32 %v261, 7
          %v263 = vsub.s32 0, %v262
          %v264 = vrot.slane %v259, %v263
          %v266 = vmul.f32 %v264, %v258
          %267 = vst.msk [vmem:[#allocation3] sm:$0xff] %vm250, %v266
          %268 = vst.msk [vmem:[#allocation2] sm:$0xff] %vm250, %v248
        $region40: #{tpu_custom_call.1} parent=35 // pred_fallthru
          _
        %v269 = vld [vmem:[#allocation3] sm:$0xff]
        %v270 = vld [vmem:[%s237] sm:$0xff]
        %v271 = vld [vmem:[%s237 + $0x8] sm:$0xff]
        %v272 = vld [vmem:[%s237 + $0x10] sm:$0xff]
        %v273 = vld [vmem:[%s237 + $0x18] sm:$0xff]
        %vm274 = vcmask 261120
        %v276 = vsel %vm274, %v269, 0
        %278 = vmatprep.subr.mxu0 0.0
        %279 = vmatpush1.msra.mxu0 0.0
        %280 = vmatprep.subr.mxu0 0.0
        %281 = vmatpush1.msra.mxu0 0.0
        %282 = vmatprep.subr.mxu0 0.0
        %283 = vmatpush1.msra.mxu0 0.0
        %284 = vmatprep.subr.mxu0 0.0
        %285 = vmatpush1.msra.mxu0 0.0
        %286 = vmatprep.subr.mxu0 0.0
        %287 = vmatpush1.msra.mxu0 0.0
        %288 = vmatprep.subr.mxu0 0.0
        %289 = vmatpush1.msra.mxu0 0.0
        %290 = vmatprep.subr.mxu0 0.0
        %291 = vmatpush1.msra.mxu0 0.0
        %292 = vmatprep.subr.mxu0 0.0
        %293 = vmatpush1.msra.mxu0 0.0
        %294 = vmatprep.subr.mxu0 0.0
        %295 = vmatpush1.msra.mxu0 0.0
        %296 = vmatprep.subr.mxu0 0.0
        %297 = vmatpush1.msra.mxu0 0.0
        %298 = vmatprep.subr.mxu0 0.0
        %299 = vmatpush1.msra.mxu0 0.0
        %300 = vmatprep.subr.mxu0 0.0
        %301 = vmatpush1.msra.mxu0 0.0
        %302 = vmatprep.subr.mxu0 0.0
        %303 = vmatpush1.msra.mxu0 %v273
        %304 = vmatprep.subr.mxu0 0.0
        %305 = vmatpush1.msra.mxu0 %v272
        %306 = vmatprep.subr.mxu0 0.0
        %307 = vmatpush1.msra.mxu0 %v271
        %308 = vmatprep.subr.mxu0 0.0
        %309 = vmatpush1.msra.mxu0 %v270
        %310 = vmatprep.subr.mxu0 0.0
        %311 = vmatpush2.msra.mxu0 0.0
        %312 = vmatprep.subr.mxu0 0.0
        %313 = vmatpush2.msra.mxu0 0.0
        %314 = vmatprep.subr.mxu0 0.0
        %315 = vmatpush2.msra.mxu0 0.0
        %316 = vmatprep.subr.mxu0 0.0
        %317 = vmatpush2.msra.mxu0 0.0
        %318 = vmatprep.subr.mxu0 0.0
        %319 = vmatpush2.msra.mxu0 0.0
        %320 = vmatprep.subr.mxu0 0.0
        %321 = vmatpush2.msra.mxu0 0.0
        %322 = vmatprep.subr.mxu0 0.0
        %323 = vmatpush2.msra.mxu0 0.0
        %324 = vmatprep.subr.mxu0 0.0
        %325 = vmatpush2.msra.mxu0 0.0
        %326 = vmatprep.subr.mxu0 0.0
        %327 = vmatpush2.msra.mxu0 0.0
        %328 = vmatprep.subr.mxu0 0.0
        %329 = vmatpush2.msra.mxu0 0.0
        %330 = vmatprep.subr.mxu0 0.0
        %331 = vmatpush2.msra.mxu0 0.0
        %332 = vmatprep.subr.mxu0 0.0
        %333 = vmatpush2.msra.mxu0 0.0
        %334 = vmatprep.subr.mxu0 0.0
        %335 = vmatpush2.msra.mxu0 0.0
        %336 = vmatprep.subr.mxu0 0.0
        %337 = vmatpush2.msra.mxu0 0.0
        %338 = vmatprep.subr.mxu0 0.0
        %339 = vmatpush2.msra.mxu0 0.0
        %340 = vmatprep.subr.mxu0 0.0
        %341 = vmatpush2.msra.mxu0 0.0
        %342 = vmatprep.mubr.f32.mxu0 0.0
        %343 = vmatmul.mubr.f32.gmra.mxu0 %v276
        %v344 = vpop.f32.mrf.mxu0
        %v345 = vadd.f32 0.0, %v344
        %v346 = vpop.f32.mrf.mxu0
        %347 = vdwg.mxu0
        %v348 = vmax.f32 %v345, 0.0
        %v349 = vld [vmem:[#allocation2] sm:$0xff]
        %v350 = vld [vmem:[%s242] sm:$0xff]
        %v351 = vld [vmem:[%s242 + $0x8] sm:$0xff]
        %v352 = vld [vmem:[%s242 + $0x10] sm:$0xff]
        %v353 = vld [vmem:[%s242 + $0x18] sm:$0xff]
        %v354 = vld [vmem:[%s242 + $0x20] sm:$0xff]
        %v355 = vld [vmem:[%s242 + $0x28] sm:$0xff]
        %v356 = vld [vmem:[%s242 + $0x30] sm:$0xff]
        %v357 = vld [vmem:[%s242 + $0x38] sm:$0xff]
        %vm358 = vcmask 523264
        %v360 = vsel %vm358, %v348, 0
        %362 = vmatprep.subr.mxu0 0.0
        %363 = vmatpush1.msra.mxu0 0.0
        %364 = vmatprep.subr.mxu0 0.0
        %365 = vmatpush1.msra.mxu0 0.0
        %366 = vmatprep.subr.mxu0 0.0
        %367 = vmatpush1.msra.mxu0 0.0
        %368 = vmatprep.subr.mxu0 0.0
        %369 = vmatpush1.msra.mxu0 0.0
        %370 = vmatprep.subr.mxu0 0.0
        %371 = vmatpush1.msra.mxu0 0.0
        %372 = vmatprep.subr.mxu0 0.0
        %373 = vmatpush1.msra.mxu0 0.0
        %374 = vmatprep.subr.mxu0 0.0
        %375 = vmatpush1.msra.mxu0 0.0
        %376 = vmatprep.subr.mxu0 0.0
        %377 = vmatpush1.msra.mxu0 0.0
        %378 = vmatprep.subr.mxu0 0.0
        %379 = vmatpush1.msra.mxu0 %v357
        %380 = vmatprep.subr.mxu0 0.0
        %381 = vmatpush1.msra.mxu0 %v356
        %382 = vmatprep.subr.mxu0 0.0
        %383 = vmatpush1.msra.mxu0 %v355
        %384 = vmatprep.subr.mxu0 0.0
        %385 = vmatpush1.msra.mxu0 %v354
        %386 = vmatprep.subr.mxu0 0.0
        %387 = vmatpush1.msra.mxu0 %v353
        %388 = vmatprep.subr.mxu0 0.0
        %389 = vmatpush1.msra.mxu0 %v352
        %390 = vmatprep.subr.mxu0 0.0
        %391 = vmatpush1.msra.mxu0 %v351
        %392 = vmatprep.subr.mxu0 0.0
        %393 = vmatpush1.msra.mxu0 %v350
        %394 = vmatprep.subr.mxu0 0.0
        %395 = vmatpush2.msra.mxu0 0.0
        %396 = vmatprep.subr.mxu0 0.0
        %397 = vmatpush2.msra.mxu0 0.0
        %398 = vmatprep.subr.mxu0 0.0
        %399 = vmatpush2.msra.mxu0 0.0
        %400 = vmatprep.subr.mxu0 0.0
        %401 = vmatpush2.msra.mxu0 0.0
        %402 = vmatprep.subr.mxu0 0.0
        %403 = vmatpush2.msra.mxu0 0.0
        %404 = vmatprep.subr.mxu0 0.0
        %405 = vmatpush2.msra.mxu0 0.0
        %406 = vmatprep.subr.mxu0 0.0
        %407 = vmatpush2.msra.mxu0 0.0
        %408 = vmatprep.subr.mxu0 0.0
        %409 = vmatpush2.msra.mxu0 0.0
        %410 = vmatprep.subr.mxu0 0.0
        %411 = vmatpush2.msra.mxu0 0.0
        %412 = vmatprep.subr.mxu0 0.0
        %413 = vmatpush2.msra.mxu0 0.0
        %414 = vmatprep.subr.mxu0 0.0
        %415 = vmatpush2.msra.mxu0 0.0
        %416 = vmatprep.subr.mxu0 0.0
        %417 = vmatpush2.msra.mxu0 0.0
        %418 = vmatprep.subr.mxu0 0.0
        %419 = vmatpush2.msra.mxu0 0.0
        %420 = vmatprep.subr.mxu0 0.0
        %421 = vmatpush2.msra.mxu0 0.0
        %422 = vmatprep.subr.mxu0 0.0
        %423 = vmatpush2.msra.mxu0 0.0
        %424 = vmatprep.subr.mxu0 0.0
        %425 = vmatpush2.msra.mxu0 0.0
        %426 = vmatprep.mubr.f32.mxu0 0.0
        %427 = vmatmul.mubr.f32.gmra.mxu0 %v360
        %v428 = vpop.f32.mrf.mxu0
        %v429 = vadd.f32 0.0, %v428
        %v430 = vpop.f32.mrf.mxu0
        %431 = vdwg.mxu0
        %v432 = vadd.f32 %v349, %v429
        %433 = vst.msk [vmem:[#allocation2] sm:$0xff] %vm274, %v432
        // Predicated region
        $region41: #{tpu_custom_call.1} parent=35 // pred_check
          %p434 = pneg %p244
        $region42: #{tpu_custom_call.1} parent=35 // pred_check_branch
          %436 = sbr.rel (%p434) target = $region44
        $region43: #{tpu_custom_call.1} parent=35 // pred_region
          %v437 = vld [vmem:[#allocation2] sm:$0xff]
          %438 = vst.msk [vmem:[%s229] sm:$0xff] %vm274, %v437
        $region44: #{tpu_custom_call.1} parent=35 // pred_fallthru
          _
        %s439 = sand.u32 %s137, 1
        %s440 = scalar_lea.sflag [#allocation5], %s439
        %s441 = sand.u32 %s137, 1
        %s442 = smul.addr %s441, 8
        %s443 = scalar_lea.vmem [#allocation4], %s442
        // Predicated region
        $region45: #{tpu_custom_call.1} parent=35 // pred_check
          %p444 = pneg %p147
        $region46: #{tpu_custom_call.1} parent=35 // pred_check_branch
          %446 = sbr.rel (%p444) target = $region48
        $region47: #{tpu_custom_call.1} parent=35 // pred_region
          %s448 = ssub.s32 128, 128
          %449 = vsyncadd %s440, %s448
          %s450 = smul.addr %s22, 128
          %s451 = scalar_lea.hbm %s4, %s450
          %s453 = sshll.u32 %s443, 4
          %s454 = int_to_ptr.vmem [resolvable:$true] %s453
          %456 = dma.vmem_to_hbm [thread:$0]  %s454, 128, %s451, %s440
        $region48: #{tpu_custom_call.1} parent=35 // pred_fallthru
          _
      $region36: #{tpu_custom_call.1} parent=5 // pred_fallthru
        _
      %p457 = scmp.le.s32.totalorder 2, %s13
      // Predicated region
      $region49: #{tpu_custom_call.1} parent=5 // pred_check
        %p458 = pneg %p457
      $region50: #{tpu_custom_call.1} parent=5 // pred_check_branch
        %460 = sbr.rel (%p458) target = $region52
      $region51: #{tpu_custom_call.1} parent=5 // pred_region
        %s461 = ssub.s32 %s13, 2
        // Predicated region
        $region53: #{tpu_custom_call.1} parent=51 // pred_check
          %p462 = pneg %p153
        $region54: #{tpu_custom_call.1} parent=51 // pred_check_branch
          %464 = sbr.rel (%p462) target = $region56
        $region55: #{tpu_custom_call.1} parent=51 // pred_region
          %s465 = sand.u32 %s138, 1
          %s466 = scalar_lea.sflag [#allocation5], %s465
          %s467 = sand.u32 %s138, 1
          %s468 = smul.addr %s467, 8
          %s469 = scalar_lea.vmem [#allocation4], %s468
          %470 = dma.done %s466, 128
        $region56: #{tpu_custom_call.1} parent=51 // pred_fallthru
          _
      $region52: #{tpu_custom_call.1} parent=5 // pred_fallthru
        _
    $region6: #{tpu_custom_call.1} parent=1 // loop_footer
      %s17 = sadd.s32 1, %s13
    $region7: #{tpu_custom_call.1} parent=1 // loop_footer_branch
      %12 = sbr.rel target = $region3
    $region8: #{tpu_custom_call.1} parent=1 // loop_exit
      _
    %471 = vsyncpa [#allocation5], 1
    %s472 = scalar_lea.sflag [#allocation5], 1
    %473 = vsyncpa %s472, 1

</llo_original>
